<compile_context>
chip_gen: v7x
topology: tpu7x:2x2x1
jax: 0.10.0
libtpu: 0.0.40
codegen_flags: <defaults>
</compile_context>

<pallas_src>
import jax
import jax.numpy as jnp
from jax.experimental import pallas as pl
from jax.experimental.pallas import tpu as pltpu


def _cos_loss_kernel(params_ref, y_ref, score_ref, out_ref):
    # params_ref: SMEM-prefetched (2,) f32 = [alpha, scale]
    # y_ref:      (1, TB)  int32 labels (lane-dense)
    # score_ref:  (TB, C)  logits (f32 or bf16)
    # out_ref:    (1, TB)  f32 per-sample loss (lane-dense)
    alpha = params_ref[0]
    scale = params_ref[1]

    score = score_ref[...].astype(jnp.float32)                 # (TB, C) f32
    tb, c = score.shape

    y = y_ref[0, :]                                            # (TB,) int32
    col_ids = jax.lax.broadcasted_iota(jnp.int32, (tb, c), 1)
    mask = col_ids == y[:, None]                               # bool (TB, C)

    # value = scale * where(onehot, score - alpha, score)
    value = scale * jnp.where(mask, score - alpha, score)      # (TB, C)

    # Stable per-row logsumexp over classes.
    m = jnp.max(value, axis=1, keepdims=True)                  # (TB, 1)
    lse = m[:, 0] + jnp.log(jnp.sum(jnp.exp(value - m), axis=1))  # (TB,)

    # Gather value[i, y[i]] with the same mask (no dynamic gather / no MXU).
    label_logit = jnp.sum(jnp.where(mask, value, 0.0), axis=1)    # (TB,)

    out_ref[0, :] = lse - label_logit


def _pick_batch_tile(B, C, itemsize):
    """Largest lane-aligned batch tile dividing B that fits the VMEM budget."""
    budget = 8 * 1024 * 1024  # double-buffered score tile budget (bytes)
    cands = [tb for tb in (1024, 512, 256, 128)
             if B % tb == 0 and 2 * tb * C * itemsize <= budget]
    if not cands:
        # Batch not a multiple of 128: fall back to a single full-array block
        # (always legal; fine for small demo batches).
        return B
    for tb in cands:              # descending: biggest tile with >= 4 grid steps
        if B // tb >= 4:          # keeps both v7x TensorCores busy
            return tb
    return cands[-1]              # otherwise smallest candidate -> most steps


def cos_loss(score, y, *, alpha=0.2, scale=32.0, block_b=None):
    """score: (B, C) float logits, y: (B,) int labels -> (B,) f32 per-sample loss."""
    B, C = score.shape
    tb = _pick_batch_tile(B, C, jnp.dtype(score.dtype).itemsize) if block_b is None else block_b
    assert B % tb == 0, "batch must be divisible by the batch tile"

    y2 = y.astype(jnp.int32).reshape(1, B)          # lane-dense 2-D labels
    params = jnp.array([alpha, scale], dtype=jnp.float32)

    out = pl.pallas_call(
        _cos_loss_kernel,
        out_shape=jax.ShapeDtypeStruct((1, B), jnp.float32),
        grid_spec=pltpu.PrefetchScalarGridSpec(
            num_scalar_prefetch=1,
            grid=(B // tb,),
            in_specs=[
                pl.BlockSpec((1, tb), lambda i, p: (0, i)),    # labels
                pl.BlockSpec((tb, C), lambda i, p: (i, 0)),    # logits
            ],
            out_specs=pl.BlockSpec((1, tb), lambda i, p: (0, i)),
        ),
        compiler_params=pltpu.CompilerParams(
            dimension_semantics=("parallel",),
            vmem_limit_bytes=32 * 1024 * 1024,
        ),
    )(params, y2, score)
    return out.reshape(B)


def cos_loss_ref(score, y, *, alpha=0.2, scale=32.0):
    """Pure-JAX reference mirroring the PyTorch forward."""
    s32 = score.astype(jnp.float32)
    onehot = jax.nn.one_hot(y, score.shape[1], dtype=jnp.float32)
    value = scale * (onehot * (s32 - alpha) + (1.0 - onehot) * s32)
    lse = jax.scipy.special.logsumexp(value, axis=1)
    label_logit = jnp.take_along_axis(value, y[:, None].astype(jnp.int32), axis=1)[:, 0]
    return lse - label_logit


if __name__ == "__main__":
    key = jax.random.PRNGKey(0)
    num_cls = 512                       # module default num_cls
    k1, k2, k3, k4 = jax.random.split(key, 4)

    # Small demo shape (single block == full array path).
    B1 = 8
    score1 = jax.random.normal(k1, (B1, num_cls), dtype=jnp.float32)
    y1 = jax.random.randint(k2, (B1,), 0, num_cls, dtype=jnp.int32)
    out1 = jax.block_until_ready(cos_loss(score1, y1, alpha=0.2, scale=32.0))
    ref1 = cos_loss_ref(score1, y1, alpha=0.2, scale=32.0)
    assert out1.shape == (B1,)
    assert jnp.allclose(out1, ref1, rtol=1e-5, atol=1e-4), (out1, ref1)

    # Tiled path (lane-aligned 128-row batch tiles, multi-step grid).
    B2 = 256
    score2 = jax.random.normal(k3, (B2, num_cls), dtype=jnp.float32)
    y2 = jax.random.randint(k4, (B2,), 0, num_cls, dtype=jnp.int32)
    out2 = jax.block_until_ready(cos_loss(score2, y2, alpha=0.2, scale=32.0))
    ref2 = cos_loss_ref(score2, y2, alpha=0.2, scale=32.0)
    assert out2.shape == (B2,)
    assert jnp.allclose(out2, ref2, rtol=1e-5, atol=1e-4), (out2, ref2)

    print("KERNEL_OK")
</pallas_src>

<mosaic_0001>
module attributes {stable_mosaic.version = 11 : i64} {
  func.func @_cos_loss_kernel(%arg0: i32, %arg1: memref<2xf32, #tpu.memory_space<smem>>, %arg2: memref<1x8xi32, #tpu.memory_space<vmem>>, %arg3: memref<8x512xf32, #tpu.memory_space<vmem>>, %arg4: memref<1x8xf32, #tpu.memory_space<vmem>>) attributes {dimension_semantics = [#tpu.dimension_semantics<parallel>], iteration_bounds = array<i64: 1>, scalar_prefetch = 1 : i64, scratch_operands = 0 : i64, tpu.core_type = #tpu.core_type<tc>, window_params = [{transform_indices = @transform_0, window_bounds = array<i64: 1, 8>}, {transform_indices = @transform_1, window_bounds = array<i64: 8, 512>}, {transform_indices = @transform_2, window_bounds = array<i64: 1, 8>}]} {
    %c0 = arith.constant 0 : index
    %0 = memref.load %arg1[%c0] : memref<2xf32, #tpu.memory_space<smem>>
    %c1 = arith.constant 1 : index
    %1 = memref.load %arg1[%c1] : memref<2xf32, #tpu.memory_space<smem>>
    %c0_0 = arith.constant 0 : index
    %c0_1 = arith.constant 0 : index
    %2 = vector.load %arg3[%c0_0, %c0_1] : memref<8x512xf32, #tpu.memory_space<vmem>>, vector<8x512xf32>
    %c0_2 = arith.constant 0 : index
    %c0_3 = arith.constant 0 : index
    %3 = vector.load %arg2[%c0_2, %c0_3] : memref<1x8xi32, #tpu.memory_space<vmem>>, vector<1x8xi32>
    %4 = vector.shape_cast %3 : vector<1x8xi32> to vector<8xi32>
    %5 = tpu.iota {dimensions = array<i32: 1>} : vector<8x512xi32>
    %6 = vector.shape_cast %4 : vector<8xi32> to vector<8x1xi32>
    %7 = vector.broadcast %6 : vector<8x1xi32> to vector<8x512xi32>
    %8 = arith.cmpi eq, %5, %7 : vector<8x512xi32>
    %9 = vector.broadcast %0 : f32 to vector<8x512xf32>
    %10 = arith.subf %2, %9 : vector<8x512xf32>
    %11 = arith.select %8, %10, %2 : vector<8x512xi1>, vector<8x512xf32>
    %12 = vector.broadcast %1 : f32 to vector<8x512xf32>
    %13 = arith.mulf %12, %11 : vector<8x512xf32>
    %cst = arith.constant dense<0xFF800000> : vector<8xf32>
    %14 = vector.multi_reduction <maximumf>, %13, %cst [1] : vector<8x512xf32> to vector<8xf32>
    %15 = vector.shape_cast %14 : vector<8xf32> to vector<8x1xf32>
    %16 = vector.shape_cast %15 : vector<8x1xf32> to vector<8xf32>
    %17 = vector.broadcast %15 : vector<8x1xf32> to vector<8x512xf32>
    %18 = arith.subf %13, %17 : vector<8x512xf32>
    %19 = math.exp %18 : vector<8x512xf32>
    %cst_4 = arith.constant dense<0.000000e+00> : vector<8xf32>
    %20 = vector.multi_reduction <add>, %19, %cst_4 [1] : vector<8x512xf32> to vector<8xf32>
    %21 = math.log %20 : vector<8xf32>
    %22 = arith.addf %16, %21 : vector<8xf32>
    %cst_5 = arith.constant 0.000000e+00 : f32
    %23 = vector.broadcast %cst_5 : f32 to vector<8x512xf32>
    %24 = arith.select %8, %13, %23 : vector<8x512xi1>, vector<8x512xf32>
    %cst_6 = arith.constant dense<0.000000e+00> : vector<8xf32>
    %25 = vector.multi_reduction <add>, %24, %cst_6 [1] : vector<8x512xf32> to vector<8xf32>
    %26 = arith.subf %22, %25 : vector<8xf32>
    %c0_7 = arith.constant 0 : index
    %c0_8 = arith.constant 0 : index
    %27 = vector.load %arg4[%c0_7, %c0_8] : memref<1x8xf32, #tpu.memory_space<vmem>>, vector<1x8xf32>
    %28 = vector.shape_cast %27 : vector<1x8xf32> to vector<8xf32>
    %29 = vector.shape_cast %26 : vector<8xf32> to vector<1x8xf32>
    tpu.vector_store %arg4[%c0_7, %c0_8], %29 {strides = array<i32>} : memref<1x8xf32, #tpu.memory_space<vmem>>, vector<1x8xf32>,
    return
  }
  func.func @transform_0(%arg0: i32, %arg1: memref<2xf32, #tpu.memory_space<smem>>) -> (i32, i32) {
    %c0_i32 = arith.constant 0 : i32
    %c0_i32_0 = arith.constant 0 : i32
    return %c0_i32, %arg0 : i32, i32
  }
  func.func @transform_1(%arg0: i32, %arg1: memref<2xf32, #tpu.memory_space<smem>>) -> (i32, i32) {
    %c0_i32 = arith.constant 0 : i32
    %c0_i32_0 = arith.constant 0 : i32
    return %arg0, %c0_i32 : i32, i32
  }
  func.func @transform_2(%arg0: i32, %arg1: memref<2xf32, #tpu.memory_space<smem>>) -> (i32, i32) {
    %c0_i32 = arith.constant 0 : i32
    %c0_i32_0 = arith.constant 0 : i32
    return %c0_i32, %arg0 : i32, i32
  }
}

</mosaic_0001>

<llo_original>
// kernel: tpu_custom_call.1
$region0: #{tpu_custom_call.1}
  #allocation0 [shape = 'u32[]', space=smem, size = 0x4, offset = 0x4, fixed_abs, tag = 'smem constant byte address 0x4 - core index']
  #allocation1 [shape = 'u32[144,128]{1,0:T(1,128)}', space=vmem, size = 0x12000, scoped, tag = 'internal scratch']
  #allocation2 [shape = 's32[1]{0}', space=sflag, size = 0x4, scoped, tag = 'scoped memory for tpu_custom_call.1']
  #allocation3 [shape = 'u8[512]{0}', space=smem, size = 0x200, scoped, tag = 'prefetched SMEM operand 0']
  %s0 = inlined_call_operand.hbm [shape: f32[2], index: 0, kind: input, shape index: {}]
  %s1 = inlined_call_operand.vmem [shape: s32[1,8], index: 1, kind: input, shape index: {}]
  %s2 = inlined_call_operand.hbm [shape: f32[8,512], index: 2, kind: input, shape index: {}]
  %s3 = inlined_call_operand.hbm [shape: f32[1,8], index: 3, kind: output, shape index: {}]
  %s4 = sld [smem:[#allocation0]]
  $region22: #{tpu_custom_call.1} parent=0
    _
  %s6 = ssub.s32 1, %s4
  %s7 = scalar_select 0, %s6, %s4
  %9 = dma.hbm_to_smem %s0, 16, [#allocation3], [#allocation2]
  %10 = dma.done [#allocation2], 16
  %11 = sfence
  $region1: #{tpu_custom_call.1} parent=0
    #allocation4 [shape = 'u8[16384]{0}', space=vmem, size = 0x4000, scoped, tag = 'input window, operand 2, single buffered']
    #allocation5 [shape = 's32[1]{0}', space=sflag, size = 0x4, scoped, tag = 'scoped memory for tpu_custom_call.1']
    #allocation6 [shape = 's32[1]{0}', space=sflag, size = 0x4, scoped, tag = 'scoped memory for tpu_custom_call.1']
    #allocation7 [shape = 'u8[512]{0}', space=vmem, size = 0x400, scoped, tag = 'output window, operand 0, single buffered']
    %12 = vsyncpa [#allocation5], 0
    %13 = vsyncpa [#allocation6], 0
    // Predicated region
    $region2: #{tpu_custom_call.1} parent=1 // pred_check
      _
    $region3: #{tpu_custom_call.1} parent=1 // pred_check_branch
      %15 = sbr.rel (0) target = $region5
    $region4: #{tpu_custom_call.1} parent=1 // pred_region
      _
    $region5: #{tpu_custom_call.1} parent=1 // pred_fallthru
      _
    // Predicated region
    $region6: #{tpu_custom_call.1} parent=1 // pred_check
      _
    $region7: #{tpu_custom_call.1} parent=1 // pred_check_branch
      %17 = sbr.rel (0) target = $region9
    $region8: #{tpu_custom_call.1} parent=1 // pred_region
      %s19 = ssub.s32 512, 512
      %20 = vsyncadd [#allocation5], %s19
      %s22 = sshll.u32 [#allocation4], 4
      %s23 = int_to_ptr.vmem [resolvable:$true] %s22
      %25 = dma.hbm_to_vmem [thread:$0]  %s2, 512, %s23, [#allocation5]
    $region9: #{tpu_custom_call.1} parent=1 // pred_fallthru
      _
    // Predicated region
    $region10: #{tpu_custom_call.1} parent=1 // pred_check
      _
    $region11: #{tpu_custom_call.1} parent=1 // pred_check_branch
      %27 = sbr.rel (0) target = $region13
    $region12: #{tpu_custom_call.1} parent=1 // pred_region
      %28 = dma.done [#allocation5], 512
    $region13: #{tpu_custom_call.1} parent=1 // pred_fallthru
      _
    %s29 = sld [smem:[#allocation3]]
    %s30 = sld [smem:[#allocation3 + $0x1]]
    %v31 = vld [vmem:[#allocation4] sm:$0xff]
    %v32 = vld [vmem:[#allocation4 + $0x8] sm:$0xff]
    %v33 = vld [vmem:[#allocation4 + $0x10] sm:$0xff]
    %v34 = vld [vmem:[#allocation4 + $0x18] sm:$0xff]
    %v35 = vld [vmem:[%s1] sm:$0x1]
    %v36 = vlaneseq
    %v37 = vand.u32 %v36, 127
    %v38 = vadd.s32 %v37, 128
    %v39 = vadd.s32 %v37, 256
    %v40 = vadd.s32 %v37, 384
    %v41 = vlaneseq
    %v42 = vshrl.u32 %v41, 7
    %v43 = vsub.s32 0, %v42
    %v44 = vrot.slane %v35, %v43
    %46 = vbcast.lane.b32.xlu0 %v44, 256
    %v47 = vpop.permute.xlu0 %46
    %vm48 = vcmp.eq.s32.totalorder %v37, %v47
    %vm49 = vcmp.eq.s32.totalorder %v38, %v47
    %vm50 = vcmp.eq.s32.totalorder %v39, %v47
    %vm51 = vcmp.eq.s32.totalorder %v40, %v47
    %v52 = vstv %s29
    %v53 = vsub.f32 %v31, %v52
    %v54 = vsub.f32 %v32, %v52
    %v55 = vsub.f32 %v33, %v52
    %v56 = vsub.f32 %v34, %v52
    %v57 = vsel %vm48, %v53, %v31
    %v58 = vsel %vm49, %v54, %v32
    %v59 = vsel %vm50, %v55, %v33
    %v60 = vsel %vm51, %v56, %v34
    %v61 = vstv %s30
    %v62 = vmul.f32 %v61, %v57
    %v63 = vmul.f32 %v61, %v58
    %v64 = vmul.f32 %v61, %v59
    %v65 = vmul.f32 %v61, %v60
    %v66 = vmax.f32 %v62, %v63
    %v67 = vmax.f32 %v64, %v65
    %v68 = vmax.f32 %v66, %v67
    %69 = vmax.xlane.f32.xlu0 %v68
    %v70 = vpop.xlane.xlu0 %69
    %v71 = vsub.f32 %v62, %v70
    %v72 = vsub.f32 %v63, %v70
    %v73 = vsub.f32 %v64, %v70
    %v74 = vsub.f32 %v65, %v70
    %v75 = vmul.f32 %v71, 1.442695
    %v76 = vpow.pop %v75
    %v77 = vmul.f32 %v72, 1.442695
    %v78 = vpow.pop %v77
    %v79 = vmul.f32 %v73, 1.442695
    %v80 = vpow.pop %v79
    %v81 = vmul.f32 %v74, 1.442695
    %v82 = vpow.pop %v81
    %v83 = vadd.f32 %v76, %v78
    %v84 = vadd.f32 %v83, %v80
    %v85 = vadd.f32 %v84, %v82
    %86 = vadd.xlane.f32.xlu0 %v85
    %v87 = vpop.xlane.xlu0 %86
    %v88 = vlog2.pop %v87
    %v89 = vmul.f32 %v88, 0.6931472
    %v90 = vadd.f32 %v70, %v89
    %v91 = vsel %vm48, %v62, 0.0
    %v92 = vsel %vm49, %v63, 0.0
    %v93 = vsel %vm50, %v64, 0.0
    %v94 = vsel %vm51, %v65, 0.0
    %v95 = vadd.f32 %v91, %v92
    %v96 = vadd.f32 %v95, %v93
    %v97 = vadd.f32 %v96, %v94
    %98 = vadd.xlane.f32.xlu0 %v97
    %v99 = vpop.xlane.xlu0 %98
    %v100 = vsub.f32 %v90, %v99
    %v102 = vlaneseq
    %v103 = vshrl.u32 %v102, 7
    %v104 = vsub.s32 %v37, %v103
    %v105 = vrot.slane %v100, %v104
    %vm107 = vcmask 57344
    %108 = vst.msk [vmem:[#allocation7] sm:$0x1] %vm107, %v105
    // Predicated region
    $region14: #{tpu_custom_call.1} parent=1 // pred_check
      _
    $region15: #{tpu_custom_call.1} parent=1 // pred_check_branch
      %110 = sbr.rel (0) target = $region17
    $region16: #{tpu_custom_call.1} parent=1 // pred_region
      %s112 = ssub.s32 16, 16
      %113 = vsyncadd [#allocation6], %s112
      %s115 = sshll.u32 [#allocation7], 4
      %s116 = int_to_ptr.vmem [resolvable:$true] %s115
      %118 = dma.vmem_to_hbm [thread:$0]  %s116, 16, %s3, [#allocation6]
    $region17: #{tpu_custom_call.1} parent=1 // pred_fallthru
      _
    // Predicated region
    $region18: #{tpu_custom_call.1} parent=1 // pred_check
      _
    $region19: #{tpu_custom_call.1} parent=1 // pred_check_branch
      %120 = sbr.rel (0) target = $region21
    $region20: #{tpu_custom_call.1} parent=1 // pred_region
      %121 = dma.done [#allocation6], 16
    $region21: #{tpu_custom_call.1} parent=1 // pred_fallthru
      _
    %122 = vsyncpa [#allocation5], 1
    %123 = vsyncpa [#allocation6], 1

</llo_original>
